<compile_context>
chip_gen: v7x
topology: tpu7x:2x2x1
jax: 0.10.0
libtpu: 0.0.40
codegen_flags: <defaults>
</compile_context>

<pallas_src>
import functools

import jax
import jax.numpy as jnp
from jax.experimental import pallas as pl
from jax.experimental.pallas import tpu as pltpu

LANES = 128
SUBLANES = 8
TM_MAX = 8192      # rows per block; multiple of 32 so int8/bf16/f32 tiles are all legal


def _tpr_kernel(x_ref, t_ref, out_ref, tp_acc, pos_acc, *, tm, rows, spc, ncores):
    if ncores > 1:
        c = pl.program_id(0)       # core-parallel stream split (v7x only)
        i = pl.program_id(1)       # reduction step ("arbitrary")
        nsteps = pl.num_programs(1)
    else:
        c = 0
        i = pl.program_id(0)
        nsteps = pl.num_programs(0)

    @pl.when(i == 0)
    def _():
        tp_acc[...] = jnp.zeros_like(tp_acc)
        pos_acc[...] = jnp.zeros_like(pos_acc)

    # Unclamped logical start row of this block.  A clamped (duplicate) overshoot
    # block has start_row >= rows, lands in the tail branch, and contributes 0.
    start_row = (c * spc + i) * tm

    def _accumulate(posf, pred):
        tpf = jnp.where(pred, posf, 0.0)
        # Per-block reduce to one vreg (8,128): VALU adds only, no cross-sublane
        # XLU reduce and no masked sub-vreg store on the hot path.
        pos_acc[...] += posf.reshape(tm // SUBLANES, SUBLANES, LANES).sum(axis=0)
        tp_acc[...] += tpf.reshape(tm // SUBLANES, SUBLANES, LANES).sum(axis=0)

    # Hot path: full interior block, no masking work at all.
    @pl.when(start_row + tm <= rows)
    def _():
        pred = x_ref[...] > 0.5                    # torchmetrics: preds > threshold
        posf = t_ref[...].astype(jnp.float32)      # targets are 0/1
        _accumulate(posf, pred)

    # Cold path: the (at most one per core) partial / overshoot block.
    @pl.when(start_row + tm > rows)
    def _():
        pred = x_ref[...] > 0.5
        posf = t_ref[...].astype(jnp.float32)
        grow = jax.lax.broadcasted_iota(jnp.int32, (tm, LANES), 0) + start_row
        posf = jnp.where(grow < rows, posf, 0.0)   # also zeroes garbage edge rows
        _accumulate(posf, pred)

    @pl.when(i == nsteps - 1)
    def _():
        tp = jnp.sum(tp_acc[...])
        p = jnp.sum(pos_acc[...])
        lane = jax.lax.broadcasted_iota(jnp.int32, (1, LANES), 1)
        # lane-dense write: lane0 = true positives, lane1 = total positives
        out_ref[...] = jnp.where(lane == 0, tp, jnp.where(lane == 1, p, 0.0))


def _run_pallas(x2d, t2d, rows, ncores):
    tm = rows if rows <= TM_MAX else TM_MAX        # full-array block when small
    nblocks = (rows + tm - 1) // tm
    spc = (nblocks + ncores - 1) // ncores         # reduction steps per core
    last = nblocks - 1

    kernel = functools.partial(_tpr_kernel, tm=tm, rows=rows, spc=spc, ncores=ncores)

    if ncores > 1:
        grid = (ncores, spc)

        def in_map(c, i):
            # Clamp so the (at most one) overshoot step never issues an OOB block
            # DMA; its contribution is zeroed by the in-kernel tail mask.
            return (jnp.minimum(c * spc + i, last), 0)

        out_map = lambda c, i: (c, 0)
        semantics = (pltpu.CORE_PARALLEL, pltpu.ARBITRARY)
    else:
        grid = (spc,)

        def in_map(i):
            return (i, 0)

        out_map = lambda i: (0, 0)
        semantics = (pltpu.ARBITRARY,)

    return pl.pallas_call(
        kernel,
        out_shape=jax.ShapeDtypeStruct((ncores, LANES), jnp.float32),
        grid_spec=pltpu.PrefetchScalarGridSpec(
            num_scalar_prefetch=0,
            grid=grid,
            in_specs=[
                pl.BlockSpec((tm, LANES), in_map),
                pl.BlockSpec((tm, LANES), in_map),
            ],
            out_specs=pl.BlockSpec((1, LANES), out_map),
            scratch_shapes=[
                pltpu.VMEM((SUBLANES, LANES), jnp.float32),
                pltpu.VMEM((SUBLANES, LANES), jnp.float32),
            ],
        ),
        compiler_params=pltpu.CompilerParams(
            dimension_semantics=semantics,
            vmem_limit_bytes=32 * 1024 * 1024,
        ),
    )(x2d, t2d)


def _num_tensorcores():
    # Only v7x exposes 2 TensorCores per chip to a single Pallas kernel.
    try:
        kind = getattr(jax.devices()[0], "device_kind", "") or ""
    except Exception:
        return 1
    return 2 if "v7" in kind.lower() else 1


def true_positive_rate(inputs, targets):
    """inputs: float probabilities (any shape); targets: 0/1 labels, same shape."""
    x = jnp.asarray(inputs)
    if x.dtype != jnp.float32 and x.dtype != jnp.bfloat16:
        x = x.astype(jnp.float32)   # bf16 callers stream bf16 natively; f32 stays f32
    x = x.reshape(-1)

    t = jnp.asarray(targets)
    if t.dtype == jnp.bool_:
        t = t.astype(jnp.int8)      # keep the target stream narrow
    t = t.reshape(-1)

    n = x.shape[0]
    if n == 0:
        return jnp.float32(0.0)

    # Align to a whole (8, 128) chunk; zero padding contributes 0 to both counts.
    chunk = SUBLANES * LANES
    pad = (-n) % chunk
    if pad:
        x = jnp.pad(x, (0, pad))
        t = jnp.pad(t, (0, pad))
    rows = (n + pad) // LANES
    x = x.reshape(rows, LANES)
    t = t.reshape(rows, LANES)

    ncores = _num_tensorcores()
    if ncores > 1:
        try:
            parts = _run_pallas(x, t, rows, ncores)
        except Exception:
            # Conservative fallback if CORE_PARALLEL is rejected on this chip.
            parts = _run_pallas(x, t, rows, 1)
    else:
        parts = _run_pallas(x, t, rows, 1)

    tp = parts[:, 0].sum()
    p = parts[:, 1].sum()
    # torchmetrics normalize='true' maps the NaN (no-positive) row to 0.
    return jnp.where(p > 0, tp / p, jnp.float32(0.0))


if __name__ == "__main__":
    key = jax.random.PRNGKey(0)
    k1, k2 = jax.random.split(key)

    # NCHW: batch=2, channels=4, spatial=16x16
    inputs = jax.random.uniform(k1, (2, 4, 16, 16), dtype=jnp.float32)
    targets = (jax.random.uniform(k2, (2, 4, 16, 16)) > 0.5).astype(jnp.int8)

    tpr = true_positive_rate(inputs, targets)
    tpr = jax.block_until_ready(tpr)

    # plain-JAX reference check
    pred = inputs > 0.5
    pos = targets != 0
    tp = jnp.sum(pred & pos).astype(jnp.float32)
    p = jnp.sum(pos).astype(jnp.float32)
    ref = jnp.where(p > 0, tp / p, 0.0)
    assert jnp.allclose(tpr, ref, atol=1e-6), (tpr, ref)

    print("KERNEL_OK")
</pallas_src>

<mosaic_0001>
module attributes {stable_mosaic.version = 11 : i64} {
  func.func @_tpr_kernel(%arg0: i32, %arg1: memref<16x128xf32, #tpu.memory_space<vmem>>, %arg2: memref<16x128xi8, #tpu.memory_space<vmem>>, %arg3: memref<1x128xf32, #tpu.memory_space<vmem>>, %arg4: memref<8x128xf32, #tpu.memory_space<vmem>>, %arg5: memref<8x128xf32, #tpu.memory_space<vmem>>) attributes {dimension_semantics = [#tpu.dimension_semantics<arbitrary>], iteration_bounds = array<i64: 1>, scalar_prefetch = 0 : i64, scratch_operands = 2 : i64, tpu.core_type = #tpu.core_type<tc>, window_params = [{transform_indices = @transform_0, window_bounds = array<i64: 16, 128>}, {transform_indices = @transform_1, window_bounds = array<i64: 16, 128>}, {pipeline_mode = #tpu.pipeline_mode<synchronous>, transform_indices = @transform_2, window_bounds = array<i64: 1, 128>}]} {
    %c0_i32 = arith.constant 0 : i32
    %0 = arith.cmpi eq, %arg0, %c0_i32 : i32
    %1 = arith.extui %0 : i1 to i32
    %c0_i32_0 = arith.constant 0 : i32
    %2 = arith.cmpi ne, %1, %c0_i32_0 : i32
    scf.if %2 {
      %cst = arith.constant 0.000000e+00 : f32
      %16 = vector.broadcast %cst : f32 to vector<8x128xf32>
      %c0 = arith.constant 0 : index
      %c0_10 = arith.constant 0 : index
      %17 = vector.load %arg4[%c0, %c0_10] : memref<8x128xf32, #tpu.memory_space<vmem>>, vector<8x128xf32>
      tpu.vector_store %arg4[%c0, %c0_10], %16 {strides = array<i32>} : memref<8x128xf32, #tpu.memory_space<vmem>>, vector<8x128xf32>,
      %cst_11 = arith.constant 0.000000e+00 : f32
      %18 = vector.broadcast %cst_11 : f32 to vector<8x128xf32>
      %c0_12 = arith.constant 0 : index
      %c0_13 = arith.constant 0 : index
      %19 = vector.load %arg5[%c0_12, %c0_13] : memref<8x128xf32, #tpu.memory_space<vmem>>, vector<8x128xf32>
      tpu.vector_store %arg5[%c0_12, %c0_13], %18 {strides = array<i32>} : memref<8x128xf32, #tpu.memory_space<vmem>>, vector<8x128xf32>,
    } else {
    }
    %c0_i32_1 = arith.constant 0 : i32
    %3 = arith.addi %c0_i32_1, %arg0 : i32
    %c16_i32 = arith.constant 16 : i32
    %4 = arith.muli %3, %c16_i32 : i32
    %c16_i32_2 = arith.constant 16 : i32
    %5 = arith.addi %4, %c16_i32_2 : i32
    %c16_i32_3 = arith.constant 16 : i32
    %6 = arith.cmpi sle, %5, %c16_i32_3 : i32
    %7 = arith.extui %6 : i1 to i32
    %c0_i32_4 = arith.constant 0 : i32
    %8 = arith.cmpi ne, %7, %c0_i32_4 : i32
    scf.if %8 {
      %c0 = arith.constant 0 : index
      %c0_10 = arith.constant 0 : index
      %16 = vector.load %arg1[%c0, %c0_10] : memref<16x128xf32, #tpu.memory_space<vmem>>, vector<16x128xf32>
      %cst = arith.constant 5.000000e-01 : f32
      %17 = vector.broadcast %cst : f32 to vector<16x128xf32>
      %18 = arith.cmpf ogt, %16, %17 : vector<16x128xf32>
      %c0_11 = arith.constant 0 : index
      %c0_12 = arith.constant 0 : index
      %19 = vector.load %arg2[%c0_11, %c0_12] : memref<16x128xi8, #tpu.memory_space<vmem>>, vector<16x128xi8>
      %20 = arith.sitofp %19 : vector<16x128xi8> to vector<16x128xf32>
      %cst_13 = arith.constant 0.000000e+00 : f32
      %21 = vector.broadcast %cst_13 : f32 to vector<16x128xf32>
      %22 = arith.select %18, %20, %21 : vector<16x128xi1>, vector<16x128xf32>
      %c0_14 = arith.constant 0 : index
      %c0_15 = arith.constant 0 : index
      %23 = vector.load %arg5[%c0_14, %c0_15] : memref<8x128xf32, #tpu.memory_space<vmem>>, vector<8x128xf32>
      %24 = vector.shape_cast %20 : vector<16x128xf32> to vector<2x8x128xf32>
      %cst_16 = arith.constant dense<0.000000e+00> : vector<8x128xf32>
      %25 = vector.multi_reduction <add>, %24, %cst_16 [0] : vector<2x8x128xf32> to vector<8x128xf32>
      %26 = arith.addf %23, %25 : vector<8x128xf32>
      %c0_17 = arith.constant 0 : index
      %c0_18 = arith.constant 0 : index
      %27 = vector.load %arg5[%c0_17, %c0_18] : memref<8x128xf32, #tpu.memory_space<vmem>>, vector<8x128xf32>
      tpu.vector_store %arg5[%c0_17, %c0_18], %26 {strides = array<i32>} : memref<8x128xf32, #tpu.memory_space<vmem>>, vector<8x128xf32>,
      %c0_19 = arith.constant 0 : index
      %c0_20 = arith.constant 0 : index
      %28 = vector.load %arg4[%c0_19, %c0_20] : memref<8x128xf32, #tpu.memory_space<vmem>>, vector<8x128xf32>
      %29 = vector.shape_cast %22 : vector<16x128xf32> to vector<2x8x128xf32>
      %cst_21 = arith.constant dense<0.000000e+00> : vector<8x128xf32>
      %30 = vector.multi_reduction <add>, %29, %cst_21 [0] : vector<2x8x128xf32> to vector<8x128xf32>
      %31 = arith.addf %28, %30 : vector<8x128xf32>
      %c0_22 = arith.constant 0 : index
      %c0_23 = arith.constant 0 : index
      %32 = vector.load %arg4[%c0_22, %c0_23] : memref<8x128xf32, #tpu.memory_space<vmem>>, vector<8x128xf32>
      tpu.vector_store %arg4[%c0_22, %c0_23], %31 {strides = array<i32>} : memref<8x128xf32, #tpu.memory_space<vmem>>, vector<8x128xf32>,
    } else {
    }
    %c16_i32_5 = arith.constant 16 : i32
    %9 = arith.addi %4, %c16_i32_5 : i32
    %c16_i32_6 = arith.constant 16 : i32
    %10 = arith.cmpi sgt, %9, %c16_i32_6 : i32
    %11 = arith.extui %10 : i1 to i32
    %c0_i32_7 = arith.constant 0 : i32
    %12 = arith.cmpi ne, %11, %c0_i32_7 : i32
    scf.if %12 {
      %c0 = arith.constant 0 : index
      %c0_10 = arith.constant 0 : index
      %16 = vector.load %arg1[%c0, %c0_10] : memref<16x128xf32, #tpu.memory_space<vmem>>, vector<16x128xf32>
      %cst = arith.constant 5.000000e-01 : f32
      %17 = vector.broadcast %cst : f32 to vector<16x128xf32>
      %18 = arith.cmpf ogt, %16, %17 : vector<16x128xf32>
      %c0_11 = arith.constant 0 : index
      %c0_12 = arith.constant 0 : index
      %19 = vector.load %arg2[%c0_11, %c0_12] : memref<16x128xi8, #tpu.memory_space<vmem>>, vector<16x128xi8>
      %20 = arith.sitofp %19 : vector<16x128xi8> to vector<16x128xf32>
      %21 = tpu.iota {dimensions = array<i32: 0>} : vector<16x128xi32>
      %22 = vector.broadcast %4 : i32 to vector<16x128xi32>
      %23 = arith.addi %21, %22 : vector<16x128xi32>
      %c16_i32_13 = arith.constant 16 : i32
      %24 = vector.broadcast %c16_i32_13 : i32 to vector<16x128xi32>
      %25 = arith.cmpi slt, %23, %24 : vector<16x128xi32>
      %cst_14 = arith.constant 0.000000e+00 : f32
      %26 = vector.broadcast %cst_14 : f32 to vector<16x128xf32>
      %27 = arith.select %25, %20, %26 : vector<16x128xi1>, vector<16x128xf32>
      %cst_15 = arith.constant 0.000000e+00 : f32
      %28 = vector.broadcast %cst_15 : f32 to vector<16x128xf32>
      %29 = arith.select %18, %27, %28 : vector<16x128xi1>, vector<16x128xf32>
      %c0_16 = arith.constant 0 : index
      %c0_17 = arith.constant 0 : index
      %30 = vector.load %arg5[%c0_16, %c0_17] : memref<8x128xf32, #tpu.memory_space<vmem>>, vector<8x128xf32>
      %31 = vector.shape_cast %27 : vector<16x128xf32> to vector<2x8x128xf32>
      %cst_18 = arith.constant dense<0.000000e+00> : vector<8x128xf32>
      %32 = vector.multi_reduction <add>, %31, %cst_18 [0] : vector<2x8x128xf32> to vector<8x128xf32>
      %33 = arith.addf %30, %32 : vector<8x128xf32>
      %c0_19 = arith.constant 0 : index
      %c0_20 = arith.constant 0 : index
      %34 = vector.load %arg5[%c0_19, %c0_20] : memref<8x128xf32, #tpu.memory_space<vmem>>, vector<8x128xf32>
      tpu.vector_store %arg5[%c0_19, %c0_20], %33 {strides = array<i32>} : memref<8x128xf32, #tpu.memory_space<vmem>>, vector<8x128xf32>,
      %c0_21 = arith.constant 0 : index
      %c0_22 = arith.constant 0 : index
      %35 = vector.load %arg4[%c0_21, %c0_22] : memref<8x128xf32, #tpu.memory_space<vmem>>, vector<8x128xf32>
      %36 = vector.shape_cast %29 : vector<16x128xf32> to vector<2x8x128xf32>
      %cst_23 = arith.constant dense<0.000000e+00> : vector<8x128xf32>
      %37 = vector.multi_reduction <add>, %36, %cst_23 [0] : vector<2x8x128xf32> to vector<8x128xf32>
      %38 = arith.addf %35, %37 : vector<8x128xf32>
      %c0_24 = arith.constant 0 : index
      %c0_25 = arith.constant 0 : index
      %39 = vector.load %arg4[%c0_24, %c0_25] : memref<8x128xf32, #tpu.memory_space<vmem>>, vector<8x128xf32>
      tpu.vector_store %arg4[%c0_24, %c0_25], %38 {strides = array<i32>} : memref<8x128xf32, #tpu.memory_space<vmem>>, vector<8x128xf32>,
    } else {
    }
    %c0_i32_8 = arith.constant 0 : i32
    %13 = arith.cmpi eq, %arg0, %c0_i32_8 : i32
    %14 = arith.extui %13 : i1 to i32
    %c0_i32_9 = arith.constant 0 : i32
    %15 = arith.cmpi ne, %14, %c0_i32_9 : i32
    scf.if %15 {
      %c0 = arith.constant 0 : index
      %c0_10 = arith.constant 0 : index
      %16 = vector.load %arg4[%c0, %c0_10] : memref<8x128xf32, #tpu.memory_space<vmem>>, vector<8x128xf32>
      %17 = vector.shape_cast %16 : vector<8x128xf32> to vector<1x8x128xf32>
      %cst = arith.constant dense<0.000000e+00> : vector<1xf32>
      %18 = vector.multi_reduction <add>, %17, %cst [1, 2] : vector<1x8x128xf32> to vector<1xf32>
      %19 = vector.shape_cast %18 : vector<1xf32> to vector<1x1x1xf32>
      %20 = vector.extract %19[0, 0, 0] : f32 from vector<1x1x1xf32>
      %c0_11 = arith.constant 0 : index
      %c0_12 = arith.constant 0 : index
      %21 = vector.load %arg5[%c0_11, %c0_12] : memref<8x128xf32, #tpu.memory_space<vmem>>, vector<8x128xf32>
      %22 = vector.shape_cast %21 : vector<8x128xf32> to vector<1x8x128xf32>
      %cst_13 = arith.constant dense<0.000000e+00> : vector<1xf32>
      %23 = vector.multi_reduction <add>, %22, %cst_13 [1, 2] : vector<1x8x128xf32> to vector<1xf32>
      %24 = vector.shape_cast %23 : vector<1xf32> to vector<1x1x1xf32>
      %25 = vector.extract %24[0, 0, 0] : f32 from vector<1x1x1xf32>
      %26 = tpu.iota {dimensions = array<i32: 1>} : vector<1x128xi32>
      %c0_i32_14 = arith.constant 0 : i32
      %27 = vector.broadcast %c0_i32_14 : i32 to vector<1x128xi32>
      %28 = arith.cmpi eq, %26, %27 : vector<1x128xi32>
      %c1_i32 = arith.constant 1 : i32
      %29 = vector.broadcast %c1_i32 : i32 to vector<1x128xi32>
      %30 = arith.cmpi eq, %26, %29 : vector<1x128xi32>
      %cst_15 = arith.constant 0.000000e+00 : f32
      %31 = vector.broadcast %25 : f32 to vector<1x128xf32>
      %32 = vector.broadcast %cst_15 : f32 to vector<1x128xf32>
      %33 = arith.select %30, %31, %32 : vector<1x128xi1>, vector<1x128xf32>
      %34 = vector.broadcast %20 : f32 to vector<1x128xf32>
      %35 = arith.select %28, %34, %33 : vector<1x128xi1>, vector<1x128xf32>
      %c0_16 = arith.constant 0 : index
      %c0_17 = arith.constant 0 : index
      %36 = vector.load %arg3[%c0_16, %c0_17] : memref<1x128xf32, #tpu.memory_space<vmem>>, vector<1x128xf32>
      tpu.vector_store %arg3[%c0_16, %c0_17], %35 {strides = array<i32>} : memref<1x128xf32, #tpu.memory_space<vmem>>, vector<1x128xf32>,
    } else {
    }
    return
  }
  func.func @transform_0(%arg0: i32) -> (i32, i32) {
    %c0_i32 = arith.constant 0 : i32
    %c0_i32_0 = arith.constant 0 : i32
    return %arg0, %c0_i32 : i32, i32
  }
  func.func @transform_1(%arg0: i32) -> (i32, i32) {
    %c0_i32 = arith.constant 0 : i32
    %c0_i32_0 = arith.constant 0 : i32
    return %arg0, %c0_i32 : i32, i32
  }
  func.func @transform_2(%arg0: i32) -> (i32, i32) {
    %c0_i32 = arith.constant 0 : i32
    %c0_i32_0 = arith.constant 0 : i32
    %c0_i32_1 = arith.constant 0 : i32
    return %c0_i32, %c0_i32_0 : i32, i32
  }
}

</mosaic_0001>

<llo_original>
// kernel: tpu_custom_call.1
$region0: #{tpu_custom_call.1}
  #allocation0 [shape = 'u32[]', space=smem, size = 0x4, offset = 0x4, fixed_abs, tag = 'smem constant byte address 0x4 - core index']
  #allocation1 [shape = 'u32[144,128]{1,0:T(1,128)}', space=vmem, size = 0x12000, scoped, tag = 'internal scratch']
  #allocation2 [shape = 'f32[8,128]{1,0:T(8,128)}', space=vmem, size = 0x1000, scoped, tag = 'scratch operand']
  #allocation3 [shape = 'f32[8,128]{1,0:T(8,128)}', space=vmem, size = 0x1000, scoped, tag = 'scratch operand']
  %s0 = inlined_call_operand.hbm [shape: f32[16,128], index: 0, kind: input, shape index: {}]
  %s1 = inlined_call_operand.hbm [shape: s8[16,128], index: 1, kind: input, shape index: {}]
  %s2 = inlined_call_operand.hbm [shape: f32[1,128], index: 2, kind: output, shape index: {}]
  %s3 = sld [smem:[#allocation0]]
  $region42: #{tpu_custom_call.1} parent=0
    _
  %s5 = ssub.s32 1, %s3
  %s6 = scalar_select 0, %s5, %s3
  $region1: #{tpu_custom_call.1} parent=0
    #allocation4 [shape = 'u8[8192]{0}', space=vmem, size = 0x2000, scoped, tag = 'input window, operand 0, single buffered']
    #allocation5 [shape = 's32[1]{0}', space=sflag, size = 0x4, scoped, tag = 'scoped memory for tpu_custom_call.1']
    #allocation6 [shape = 's32[1]{0}', space=sflag, size = 0x4, scoped, tag = 'scoped memory for tpu_custom_call.1']
    #allocation7 [shape = 'u8[2048]{0}', space=vmem, size = 0x800, scoped, tag = 'input window, operand 1, single buffered']
    #allocation8 [shape = 's32[1]{0}', space=sflag, size = 0x4, scoped, tag = 'scoped memory for tpu_custom_call.1']
    #allocation9 [shape = 'u8[512]{0}', space=vmem, size = 0x400, scoped, tag = 'output window, operand 0, single buffered']
    %7 = vsyncpa [#allocation5], 0
    %8 = vsyncpa [#allocation8], 0
    %9 = vsyncpa [#allocation6], 0
    // Predicated region
    $region2: #{tpu_custom_call.1} parent=1 // pred_check
      _
    $region3: #{tpu_custom_call.1} parent=1 // pred_check_branch
      %11 = sbr.rel (0) target = $region5
    $region4: #{tpu_custom_call.1} parent=1 // pred_region
      %s13 = ssub.s32 256, 256
      %14 = vsyncadd [#allocation5], %s13
      %s15 = sshll.u32 [#allocation4], 4
      %s16 = int_to_ptr.vmem [resolvable:$true] %s15
      %21 = dma.hbm_to_vmem [thread:$0]  %s0, 256, %s16, [#allocation5], 128, 128, 8
    $region5: #{tpu_custom_call.1} parent=1 // pred_fallthru
      _
    // Predicated region
    $region6: #{tpu_custom_call.1} parent=1 // pred_check
      _
    $region7: #{tpu_custom_call.1} parent=1 // pred_check_branch
      %23 = sbr.rel (0) target = $region9
    $region8: #{tpu_custom_call.1} parent=1 // pred_region
      %s25 = ssub.s32 64, 64
      %26 = vsyncadd [#allocation8], %s25
      %s27 = sshll.u32 [#allocation7], 4
      %s28 = int_to_ptr.vmem [resolvable:$true] %s27
      %33 = dma.hbm_to_vmem [thread:$0]  %s1, 64, %s28, [#allocation8], 32, 32, 2
    $region9: #{tpu_custom_call.1} parent=1 // pred_fallthru
      _
    // Predicated region
    $region10: #{tpu_custom_call.1} parent=1 // pred_check
      _
    $region11: #{tpu_custom_call.1} parent=1 // pred_check_branch
      %35 = sbr.rel (0) target = $region13
    $region12: #{tpu_custom_call.1} parent=1 // pred_region
      %36 = dma.done [#allocation5], 256
    $region13: #{tpu_custom_call.1} parent=1 // pred_fallthru
      _
    // Predicated region
    $region14: #{tpu_custom_call.1} parent=1 // pred_check
      _
    $region15: #{tpu_custom_call.1} parent=1 // pred_check_branch
      %38 = sbr.rel (0) target = $region17
    $region16: #{tpu_custom_call.1} parent=1 // pred_region
      %39 = dma.done [#allocation8], 64
    $region17: #{tpu_custom_call.1} parent=1 // pred_fallthru
      _
    %p40 = scmp.eq.s32.totalorder 0, 0
    // Predicated region
    $region18: #{tpu_custom_call.1} parent=1 // pred_check
      %p41 = pneg %p40
    $region19: #{tpu_custom_call.1} parent=1 // pred_check_branch
      %43 = sbr.rel (%p41) target = $region21
    $region20: #{tpu_custom_call.1} parent=1 // pred_region
      %44 = vst [vmem:[#allocation2] sm:$0xff] 0.0
      %45 = vst [vmem:[#allocation3] sm:$0xff] 0.0
    $region21: #{tpu_custom_call.1} parent=1 // pred_fallthru
      _
    %s46 = smul.u32 0, 16
    %s47 = sadd.s32 %s46, 16
    %p48 = scmp.le.s32.totalorder %s47, 16
    // Predicated region
    $region22: #{tpu_custom_call.1} parent=1 // pred_check
      %p49 = pneg %p48
    $region23: #{tpu_custom_call.1} parent=1 // pred_check_branch
      %51 = sbr.rel (%p49) target = $region25
    $region24: #{tpu_custom_call.1} parent=1 // pred_region
      %v52 = vld [vmem:[#allocation4] sm:$0xff]
      %v53 = vld [vmem:[#allocation4 + $0x8] sm:$0xff]
      %vm54 = vcmp.gt.f32.partialorder %v52, 0.5
      %vm55 = vcmp.gt.f32.partialorder %v53, 0.5
      %v56 = vld [vmem:[#allocation7] sm:$0x3]
      %v57 = vld [vmem:[#allocation7 + $0x2] sm:$0x3]
      %v58 = vunpack.c.0.s8 %v56
      %v59 = vunpack.c.0.s8 %v57
      %v60 = vcvt.s32.f32 %v58
      %v61 = vcvt.s32.f32 %v59
      %v62 = vsel %vm54, %v60, 0.0
      %v63 = vsel %vm55, %v61, 0.0
      %v64 = vld [vmem:[#allocation3] sm:$0xff]
      %v65 = vadd.f32 %v60, %v61
      %v66 = vadd.f32 %v64, %v65
      %67 = vst [vmem:[#allocation3] sm:$0xff] %v66
      %v68 = vld [vmem:[#allocation2] sm:$0xff]
      %v69 = vadd.f32 %v62, %v63
      %v70 = vadd.f32 %v68, %v69
      %71 = vst [vmem:[#allocation2] sm:$0xff] %v70
    $region25: #{tpu_custom_call.1} parent=1 // pred_fallthru
      _
    %p72 = scmp.gt.s32.totalorder %s47, 16
    // Predicated region
    $region26: #{tpu_custom_call.1} parent=1 // pred_check
      %p73 = pneg %p72
    $region27: #{tpu_custom_call.1} parent=1 // pred_check_branch
      %75 = sbr.rel (%p73) target = $region29
    $region28: #{tpu_custom_call.1} parent=1 // pred_region
      %v76 = vld [vmem:[#allocation4] sm:$0xff]
      %v77 = vld [vmem:[#allocation4 + $0x8] sm:$0xff]
      %vm78 = vcmp.gt.f32.partialorder %v76, 0.5
      %vm79 = vcmp.gt.f32.partialorder %v77, 0.5
      %v80 = vld [vmem:[#allocation7] sm:$0x3]
      %v81 = vld [vmem:[#allocation7 + $0x2] sm:$0x3]
      %v82 = vunpack.c.0.s8 %v80
      %v83 = vunpack.c.0.s8 %v81
      %v84 = vcvt.s32.f32 %v82
      %v85 = vcvt.s32.f32 %v83
      %v86 = vlaneseq
      %v87 = vshrl.u32 %v86, 7
      %v88 = vadd.s32 %v87, 8
      %v89 = vstv %s46
      %v90 = vadd.s32 %v87, %v89
      %v91 = vadd.s32 %v88, %v89
      %vm92 = vcmp.lt.s32.totalorder %v90, 16
      %vm93 = vcmp.lt.s32.totalorder %v91, 16
      %v94 = vsel %vm92, %v84, 0.0
      %v95 = vsel %vm93, %v85, 0.0
      %v96 = vsel %vm78, %v94, 0.0
      %v97 = vsel %vm79, %v95, 0.0
      %v98 = vld [vmem:[#allocation3] sm:$0xff]
      %v99 = vadd.f32 %v94, %v95
      %v100 = vadd.f32 %v98, %v99
      %101 = vst [vmem:[#allocation3] sm:$0xff] %v100
      %v102 = vld [vmem:[#allocation2] sm:$0xff]
      %v103 = vadd.f32 %v96, %v97
      %v104 = vadd.f32 %v102, %v103
      %105 = vst [vmem:[#allocation2] sm:$0xff] %v104
    $region29: #{tpu_custom_call.1} parent=1 // pred_fallthru
      _
    // Predicated region
    $region30: #{tpu_custom_call.1} parent=1 // pred_check
      %p106 = pneg %p40
    $region31: #{tpu_custom_call.1} parent=1 // pred_check_branch
      %108 = sbr.rel (%p106) target = $region33
    $region32: #{tpu_custom_call.1} parent=1 // pred_region
      %v109 = vld [vmem:[#allocation2] sm:$0xff]
      %110 = vadd.xlane.f32.xlu0 %v109
      %v111 = vpop.xlane.xlu0 %110
      %v112 = vrot.slane %v111, 4
      %v113 = vadd.f32 %v111, %v112
      %v114 = vrot.slane %v113, 2
      %v115 = vadd.f32 %v113, %v114
      %v116 = vrot.slane %v115, 1
      %v117 = vadd.f32 %v115, %v116
      %s118 = vtos %v117
      %v119 = vld [vmem:[#allocation3] sm:$0xff]
      %120 = vadd.xlane.f32.xlu0 %v119
      %v121 = vpop.xlane.xlu0 %120
      %v122 = vrot.slane %v121, 4
      %v123 = vadd.f32 %v121, %v122
      %v124 = vrot.slane %v123, 2
      %v125 = vadd.f32 %v123, %v124
      %v126 = vrot.slane %v125, 1
      %v127 = vadd.f32 %v125, %v126
      %s128 = vtos %v127
      %v129 = vlaneseq
      %v130 = vand.u32 %v129, 127
      %vm131 = vcmp.eq.s32.totalorder %v130, 0
      %vm132 = vcmp.eq.s32.totalorder %v130, 1
      %v133 = vstv %s128
      %v134 = vsel %vm132, %v133, 0.0
      %v135 = vstv %s118
      %v136 = vsel %vm131, %v135, %v134
      %137 = vst [vmem:[#allocation9] sm:$0x1] %v136
    $region33: #{tpu_custom_call.1} parent=1 // pred_fallthru
      _
    // Predicated region
    $region34: #{tpu_custom_call.1} parent=1 // pred_check
      _
    $region35: #{tpu_custom_call.1} parent=1 // pred_check_branch
      %139 = sbr.rel (0) target = $region37
    $region36: #{tpu_custom_call.1} parent=1 // pred_region
      %s141 = ssub.s32 16, 16
      %142 = vsyncadd [#allocation6], %s141
      %s144 = sshll.u32 [#allocation9], 4
      %s145 = int_to_ptr.vmem [resolvable:$true] %s144
      %147 = dma.vmem_to_hbm [thread:$0]  %s145, 16, %s2, [#allocation6]
    $region37: #{tpu_custom_call.1} parent=1 // pred_fallthru
      _
    // Predicated region
    $region38: #{tpu_custom_call.1} parent=1 // pred_check
      _
    $region39: #{tpu_custom_call.1} parent=1 // pred_check_branch
      %149 = sbr.rel (0) target = $region41
    $region40: #{tpu_custom_call.1} parent=1 // pred_region
      %150 = dma.done [#allocation6], 16
    $region41: #{tpu_custom_call.1} parent=1 // pred_fallthru
      _
    %151 = vsyncpa [#allocation5], 1
    %152 = vsyncpa [#allocation8], 1
    %153 = vsyncpa [#allocation6], 1

</llo_original>
